<compile_context>
chip_gen: v7x
topology: tpu7x:2x2x1
jax: 0.10.0
libtpu: 0.0.40
codegen_flags: <defaults>
</compile_context>

<pallas_src>
import jax
import jax.numpy as jnp
from jax.experimental import pallas as pl
from jax.experimental.pallas import tpu as pltpu

HIDDEN = 64          # hidden width of the torch module
LANE = 128           # lane-dense padded width for intermediate layer outputs
NEG_INF = -1e30      # padded logit fill; exp(NEG_INF - m) underflows to 0.0


def _round_up(x, m):
    return (x + m - 1) // m * m


def _make_actor_kernel(sd_p, out_w):
    """Kernel for a given (sublane-padded) state dim and output width."""

    def kernel(x_ref, w_ref, b_ref, out_ref):
        # x: (TB, sd_p) f32 -> bf16 for the MXU; accumulate in f32.
        x = x_ref[...].astype(jnp.bfloat16)

        # Packed weight slab (bf16): [w1 | w2 | w3] stacked along rows,
        # every sub-block zero-padded to 128 output lanes.
        w1 = w_ref[0:sd_p, :]                       # (sd_p, 128)
        w2 = w_ref[sd_p:sd_p + LANE, :]             # (128, 128)
        w3 = w_ref[sd_p + LANE:sd_p + 2 * LANE, :]  # (128, 128)

        # Bias slab (f32, one (8,128) block): rows 0/1/2 are b1/b2/b3.
        b = b_ref[...]
        b1 = b[0:1, :]
        b2 = b[1:2, :]
        b3 = b[2:3, :]                              # padded cols hold NEG_INF

        # Layer 1: Linear + ReLU (bf16 MXU, f32 accumulate + elementwise)
        h1 = jnp.dot(x, w1, preferred_element_type=jnp.float32) + b1
        h1 = jnp.maximum(h1, 0.0)

        # Layer 2: Linear + ReLU
        h2 = jnp.dot(h1.astype(jnp.bfloat16), w2,
                     preferred_element_type=jnp.float32) + b2
        h2 = jnp.maximum(h2, 0.0)

        # Layer 3: Linear (padded logit columns become exactly NEG_INF)
        logits = jnp.dot(h2.astype(jnp.bfloat16), w3,
                         preferred_element_type=jnp.float32) + b3

        # Numerically stable softmax over the (128-lane) last axis.  Padded
        # lanes contribute exp(NEG_INF - m) == 0 to the sum, so normalizing
        # over 128 lanes equals normalizing over the real action_dim lanes.
        m = jnp.max(logits, axis=-1, keepdims=True)
        e = jnp.exp(logits - m)
        s = jnp.sum(e, axis=-1, keepdims=True)
        inv = 1.0 / s                               # exact f32 reciprocal
        # Narrow store: only the first out_w (=8) lanes hit VMEM->HBM, cutting
        # the dominant HBM write stream from 512 B/row to 32 B/row.
        out_ref[...] = (e * inv)[:, :out_w]

    return kernel


def pack_actor_params(params, state_dim, action_dim):
    """Pack 6 Linear params into one bf16 weight slab + one f32 bias slab."""
    w1, b1, w2, b2, w3, b3 = params
    sd_p = _round_up(max(state_dim, 8), 8)

    def pad2(a, rows, cols, fill=0.0):
        return jnp.pad(a, ((0, rows - a.shape[0]), (0, cols - a.shape[1])),
                       constant_values=fill)

    w_slab = jnp.concatenate(
        [pad2(w1, sd_p, LANE),        # (sd_p, 128)
         pad2(w2, LANE, LANE),        # (128, 128)
         pad2(w3, LANE, LANE)],       # (128, 128)
        axis=0).astype(jnp.bfloat16)

    b1p = pad2(b1.reshape(1, -1), 1, LANE)
    b2p = pad2(b2.reshape(1, -1), 1, LANE)
    b3p = pad2(b3.reshape(1, -1), 1, LANE, fill=NEG_INF)   # mask padded logits
    b_slab = jnp.concatenate(
        [b1p, b2p, b3p, jnp.zeros((5, LANE), jnp.float32)], axis=0
    ).astype(jnp.float32)                                  # (8, 128)

    return w_slab, b_slab


def actor_forward(states, w_slab, b_slab, state_dim, action_dim, *, tb=2048):
    """states: (B, state_dim) f32. Returns (B, action_dim) softmax probs."""
    B = states.shape[0]
    sd_p = w_slab.shape[0] - 2 * LANE
    out_w = _round_up(max(action_dim, 1), 8)   # 8 lanes for action_dim=6

    # Batch tile: multiple of 8, capped by `tb`, and sized so the grid has at
    # least 2 steps whenever B allows (v7x megacore sharding via "parallel").
    TB = min(_round_up(max(tb, 8), 8), _round_up(pl.cdiv(B, 2), 8))
    grid = (pl.cdiv(B, TB),)   # ragged last block handled by Pallas masking

    x = states.astype(jnp.float32)
    if state_dim != sd_p:      # column pad only when actually required
        x = jnp.pad(x, ((0, 0), (0, sd_p - state_dim)))

    flops = 2 * B * (sd_p * HIDDEN + HIDDEN * HIDDEN + HIDDEN * action_dim)
    bytes_accessed = (4 * B * sd_p            # input read
                      + 4 * B * out_w         # narrow output write
                      + 2 * w_slab.size       # bf16 weights (fetched once)
                      + 4 * b_slab.size)      # f32 biases
    cost = pl.CostEstimate(flops=flops,
                           transcendentals=B * (LANE + 1),
                           bytes_accessed=bytes_accessed)

    out = pl.pallas_call(
        _make_actor_kernel(sd_p, out_w),
        out_shape=jax.ShapeDtypeStruct((B, out_w), jnp.float32),
        grid=grid,
        in_specs=[
            pl.BlockSpec((TB, sd_p), lambda i: (i, 0)),       # batch-tiled x
            pl.BlockSpec(w_slab.shape, lambda i: (0, 0)),     # replicated weights
            pl.BlockSpec(b_slab.shape, lambda i: (0, 0)),     # replicated biases
        ],
        out_specs=pl.BlockSpec((TB, out_w), lambda i: (i, 0)),  # narrow output
        compiler_params=pltpu.CompilerParams(
            dimension_semantics=("parallel",)),
        cost_estimate=cost,
    )(x, w_slab, b_slab)

    return out[:, :action_dim]


def init_params(key, state_dim, action_dim, hidden=HIDDEN):
    """Deterministic synthetic init (PyTorch-Linear-style uniform bounds)."""
    ks = jax.random.split(key, 6)

    def lin(kw, kb, fan_in, fan_out):
        bound = 1.0 / jnp.sqrt(float(fan_in))
        w = jax.random.uniform(kw, (fan_in, fan_out), jnp.float32, -bound, bound)
        b = jax.random.uniform(kb, (1, fan_out), jnp.float32, -bound, bound)
        return w, b

    w1, b1 = lin(ks[0], ks[1], state_dim, hidden)
    w2, b2 = lin(ks[2], ks[3], hidden, hidden)
    w3, b3 = lin(ks[4], ks[5], hidden, action_dim)
    return (w1, b1, w2, b2, w3, b3)


def actor_forward_ref(states, params):
    """Pure-JAX f32 reference for correctness checking."""
    w1, b1, w2, b2, w3, b3 = params
    h1 = jnp.maximum(states @ w1 + b1, 0.0)
    h2 = jnp.maximum(h1 @ w2 + b2, 0.0)
    logits = h2 @ w3 + b3
    return jax.nn.softmax(logits, axis=-1)


if __name__ == "__main__":
    key = jax.random.PRNGKey(0)
    k_params, k_states, k_states2 = jax.random.split(key, 3)

    state_dim, action_dim = 16, 6
    params = init_params(k_params, state_dim, action_dim)
    w_slab, b_slab = pack_actor_params(params, state_dim, action_dim)

    # Case 1: small batch (single grid step, block == full array).
    batch = 8
    states = jax.random.normal(k_states, (batch, state_dim), dtype=jnp.float32)
    probs = actor_forward(states, w_slab, b_slab, state_dim, action_dim)
    probs = jax.block_until_ready(probs)

    ref = actor_forward_ref(states, params)
    assert probs.shape == (batch, action_dim)
    assert jnp.allclose(jnp.sum(probs, axis=-1), 1.0, atol=1e-3)
    assert jnp.max(jnp.abs(probs - ref)) < 2e-2

    # Case 2: ragged batch (2 grid steps, masked final block, no wrapper pad).
    batch2 = 37
    states2 = jax.random.normal(k_states2, (batch2, state_dim), dtype=jnp.float32)
    probs2 = actor_forward(states2, w_slab, b_slab, state_dim, action_dim)
    probs2 = jax.block_until_ready(probs2)

    ref2 = actor_forward_ref(states2, params)
    assert probs2.shape == (batch2, action_dim)
    assert jnp.allclose(jnp.sum(probs2, axis=-1), 1.0, atol=1e-3)
    assert jnp.max(jnp.abs(probs2 - ref2)) < 2e-2

    print("KERNEL_OK")
</pallas_src>

<mosaic_0001>
module attributes {stable_mosaic.version = 11 : i64} {
  func.func @kernel(%arg0: i32, %arg1: memref<8x16xf32, #tpu.memory_space<vmem>>, %arg2: memref<272x128xbf16, #tpu.memory_space<vmem>>, %arg3: memref<8x128xf32, #tpu.memory_space<vmem>>, %arg4: memref<8x8xf32, #tpu.memory_space<vmem>>) attributes {dimension_semantics = [#tpu.dimension_semantics<parallel>], iteration_bounds = array<i64: 1>, scalar_prefetch = 0 : i64, scratch_operands = 0 : i64, tpu.core_type = #tpu.core_type<tc>, window_params = [{transform_indices = @transform_0, window_bounds = array<i64: 8, 16>}, {pipeline_mode = #tpu.pipeline_mode<synchronous>, transform_indices = @transform_1, window_bounds = array<i64: 272, 128>}, {pipeline_mode = #tpu.pipeline_mode<synchronous>, transform_indices = @transform_2, window_bounds = array<i64: 8, 128>}, {transform_indices = @transform_3, window_bounds = array<i64: 8, 8>}]} {
    %c0 = arith.constant 0 : index
    %c0_0 = arith.constant 0 : index
    %0 = vector.load %arg1[%c0, %c0_0] : memref<8x16xf32, #tpu.memory_space<vmem>>, vector<8x16xf32>
    %1 = arith.truncf %0 : vector<8x16xf32> to vector<8x16xbf16>
    %c0_1 = arith.constant 0 : index
    %c0_2 = arith.constant 0 : index
    %2 = vector.load %arg2[%c0_1, %c0_2] : memref<272x128xbf16, #tpu.memory_space<vmem>>, vector<16x128xbf16>
    %c16 = arith.constant 16 : index
    %c0_3 = arith.constant 0 : index
    %3 = vector.load %arg2[%c16, %c0_3] : memref<272x128xbf16, #tpu.memory_space<vmem>>, vector<128x128xbf16>
    %c144 = arith.constant 144 : index
    %c0_4 = arith.constant 0 : index
    %4 = vector.load %arg2[%c144, %c0_4] : memref<272x128xbf16, #tpu.memory_space<vmem>>, vector<128x128xbf16>
    %c0_5 = arith.constant 0 : index
    %c0_6 = arith.constant 0 : index
    %5 = vector.load %arg3[%c0_5, %c0_6] : memref<8x128xf32, #tpu.memory_space<vmem>>, vector<8x128xf32>
    %6 = vector.extract_strided_slice %5 {offsets = [0, 0], sizes = [1, 128], strides = [1, 1]} : vector<8x128xf32> to vector<1x128xf32>
    %7 = vector.extract_strided_slice %5 {offsets = [1, 0], sizes = [1, 128], strides = [1, 1]} : vector<8x128xf32> to vector<1x128xf32>
    %8 = vector.extract_strided_slice %5 {offsets = [2, 0], sizes = [1, 128], strides = [1, 1]} : vector<8x128xf32> to vector<1x128xf32>
    %cst = arith.constant dense<0.000000e+00> : vector<8x128xf32>
    %9 = tpu.matmul %1, %2, %cst {dimension_numbers = #tpu.dot_dimension_numbers<[1], [0], [0], [1], [0, 0, 1, 1], [], []>} : vector<8x16xbf16>, vector<16x128xbf16>, vector<8x128xf32> -> vector<8x128xf32>
    %10 = vector.broadcast %6 : vector<1x128xf32> to vector<8x128xf32>
    %11 = arith.addf %9, %10 : vector<8x128xf32>
    %cst_7 = arith.constant 0.000000e+00 : f32
    %12 = vector.broadcast %cst_7 : f32 to vector<8x128xf32>
    %13 = arith.maximumf %11, %12 : vector<8x128xf32>
    %14 = arith.truncf %13 : vector<8x128xf32> to vector<8x128xbf16>
    %cst_8 = arith.constant dense<0.000000e+00> : vector<8x128xf32>
    %15 = tpu.matmul %14, %3, %cst_8 {dimension_numbers = #tpu.dot_dimension_numbers<[1], [0], [0], [1], [0, 0, 1, 1], [], []>} : vector<8x128xbf16>, vector<128x128xbf16>, vector<8x128xf32> -> vector<8x128xf32>
    %16 = vector.broadcast %7 : vector<1x128xf32> to vector<8x128xf32>
    %17 = arith.addf %15, %16 : vector<8x128xf32>
    %cst_9 = arith.constant 0.000000e+00 : f32
    %18 = vector.broadcast %cst_9 : f32 to vector<8x128xf32>
    %19 = arith.maximumf %17, %18 : vector<8x128xf32>
    %20 = arith.truncf %19 : vector<8x128xf32> to vector<8x128xbf16>
    %cst_10 = arith.constant dense<0.000000e+00> : vector<8x128xf32>
    %21 = tpu.matmul %20, %4, %cst_10 {dimension_numbers = #tpu.dot_dimension_numbers<[1], [0], [0], [1], [0, 0, 1, 1], [], []>} : vector<8x128xbf16>, vector<128x128xbf16>, vector<8x128xf32> -> vector<8x128xf32>
    %22 = vector.broadcast %8 : vector<1x128xf32> to vector<8x128xf32>
    %23 = arith.addf %21, %22 : vector<8x128xf32>
    %cst_11 = arith.constant dense<0xFF800000> : vector<8xf32>
    %24 = vector.multi_reduction <maximumf>, %23, %cst_11 [1] : vector<8x128xf32> to vector<8xf32>
    %25 = vector.shape_cast %24 : vector<8xf32> to vector<8x1xf32>
    %26 = vector.broadcast %25 : vector<8x1xf32> to vector<8x128xf32>
    %27 = arith.subf %23, %26 : vector<8x128xf32>
    %28 = math.exp %27 : vector<8x128xf32>
    %cst_12 = arith.constant dense<0.000000e+00> : vector<8xf32>
    %29 = vector.multi_reduction <add>, %28, %cst_12 [1] : vector<8x128xf32> to vector<8xf32>
    %30 = vector.shape_cast %29 : vector<8xf32> to vector<8x1xf32>
    %cst_13 = arith.constant 1.000000e+00 : f32
    %31 = vector.broadcast %cst_13 : f32 to vector<8x1xf32>
    %32 = arith.divf %31, %30 : vector<8x1xf32>
    %33 = vector.broadcast %32 : vector<8x1xf32> to vector<8x128xf32>
    %34 = arith.mulf %28, %33 : vector<8x128xf32>
    %35 = vector.extract_strided_slice %34 {offsets = [0, 0], sizes = [8, 8], strides = [1, 1]} : vector<8x128xf32> to vector<8x8xf32>
    %c0_14 = arith.constant 0 : index
    %c0_15 = arith.constant 0 : index
    %36 = vector.load %arg4[%c0_14, %c0_15] : memref<8x8xf32, #tpu.memory_space<vmem>>, vector<8x8xf32>
    tpu.vector_store %arg4[%c0_14, %c0_15], %35 {strides = array<i32>} : memref<8x8xf32, #tpu.memory_space<vmem>>, vector<8x8xf32>,
    return
  }
  func.func @transform_0(%arg0: i32) -> (i32, i32) {
    %c0_i32 = arith.constant 0 : i32
    %c0_i32_0 = arith.constant 0 : i32
    return %arg0, %c0_i32 : i32, i32
  }
  func.func @transform_1(%arg0: i32) -> (i32, i32) {
    %c0_i32 = arith.constant 0 : i32
    %c0_i32_0 = arith.constant 0 : i32
    %c0_i32_1 = arith.constant 0 : i32
    return %c0_i32, %c0_i32_0 : i32, i32
  }
  func.func @transform_2(%arg0: i32) -> (i32, i32) {
    %c0_i32 = arith.constant 0 : i32
    %c0_i32_0 = arith.constant 0 : i32
    %c0_i32_1 = arith.constant 0 : i32
    return %c0_i32, %c0_i32_0 : i32, i32
  }
  func.func @transform_3(%arg0: i32) -> (i32, i32) {
    %c0_i32 = arith.constant 0 : i32
    %c0_i32_0 = arith.constant 0 : i32
    return %arg0, %c0_i32 : i32, i32
  }
}

</mosaic_0001>

<llo_original>
// kernel: tpu_custom_call.1
$region0: #{tpu_custom_call.1}
  #allocation0 [shape = 'u32[]', space=smem, size = 0x4, offset = 0x4, fixed_abs, tag = 'smem constant byte address 0x4 - core index']
  #allocation1 [shape = 'u32[144,128]{1,0:T(1,128)}', space=vmem, size = 0x12000, scoped, tag = 'internal scratch']
  %s0 = inlined_call_operand.hbm [shape: f32[8,16], index: 0, kind: input, shape index: {}]
  %s1 = inlined_call_operand.hbm [shape: bf16[272,128], index: 1, kind: input, shape index: {}]
  %s2 = inlined_call_operand.hbm [shape: f32[8,128], index: 2, kind: input, shape index: {}]
  %s3 = inlined_call_operand.hbm [shape: f32[8,8], index: 3, kind: output, shape index: {}]
  %s4 = sld [smem:[#allocation0]]
  $region34: #{tpu_custom_call.1} parent=0
    _
  %s6 = ssub.s32 1, %s4
  %s7 = scalar_select 0, %s6, %s4
  $region1: #{tpu_custom_call.1} parent=0
    #allocation2 [shape = 'u8[4096]{0}', space=vmem, size = 0x1000, scoped, tag = 'input window, operand 0, single buffered']
    #allocation3 [shape = 's32[1]{0}', space=sflag, size = 0x4, scoped, tag = 'scoped memory for tpu_custom_call.1']
    #allocation4 [shape = 's32[1]{0}', space=sflag, size = 0x4, scoped, tag = 'scoped memory for tpu_custom_call.1']
    #allocation5 [shape = 'u8[69632]{0}', space=vmem, size = 0x11000, scoped, tag = 'input window, operand 1, single buffered']
    #allocation6 [shape = 's32[1]{0}', space=sflag, size = 0x4, scoped, tag = 'scoped memory for tpu_custom_call.1']
    #allocation7 [shape = 'u8[4096]{0}', space=vmem, size = 0x1000, scoped, tag = 'input window, operand 2, single buffered']
    #allocation8 [shape = 'u8[4096]{0}', space=vmem, size = 0x1000, scoped, tag = 'output window, operand 0, single buffered']
    %8 = vsyncpa [#allocation3], 0
    %9 = vsyncpa [#allocation6], 0
    %10 = vsyncpa [#allocation4], 0
    // Predicated region
    $region2: #{tpu_custom_call.1} parent=1 // pred_check
      _
    $region3: #{tpu_custom_call.1} parent=1 // pred_check_branch
      %12 = sbr.rel (0) target = $region5
    $region4: #{tpu_custom_call.1} parent=1 // pred_region
      %s14 = ssub.s32 128, 128
      %15 = vsyncadd [#allocation3], %s14
      %s17 = sshll.u32 [#allocation2], 4
      %s18 = int_to_ptr.vmem [resolvable:$true] %s17
      %20 = dma.hbm_to_vmem [thread:$0]  %s0, 128, %s18, [#allocation3]
    $region5: #{tpu_custom_call.1} parent=1 // pred_fallthru
      _
    // Predicated region
    $region6: #{tpu_custom_call.1} parent=1 // pred_check
      _
    $region7: #{tpu_custom_call.1} parent=1 // pred_check_branch
      %22 = sbr.rel (0) target = $region9
    $region8: #{tpu_custom_call.1} parent=1 // pred_region
      %s24 = ssub.s32 2176, 2176
      %25 = vsyncadd [#allocation6], %s24
      %s26 = sshll.u32 [#allocation5], 4
      %s27 = int_to_ptr.vmem [resolvable:$true] %s26
      %32 = dma.hbm_to_vmem [thread:$0]  %s1, 2176, %s27, [#allocation6], 64, 64, 4
    $region9: #{tpu_custom_call.1} parent=1 // pred_fallthru
      _
    // Predicated region
    $region10: #{tpu_custom_call.1} parent=1 // pred_check
      _
    $region11: #{tpu_custom_call.1} parent=1 // pred_check_branch
      %34 = sbr.rel (0) target = $region13
    $region12: #{tpu_custom_call.1} parent=1 // pred_region
      %s36 = ssub.s32 128, 128
      %37 = vsyncadd [#allocation6], %s36
      %s39 = sshll.u32 [#allocation7], 4
      %s40 = int_to_ptr.vmem [resolvable:$true] %s39
      %42 = dma.hbm_to_vmem [thread:$0]  %s2, 128, %s40, [#allocation6]
    $region13: #{tpu_custom_call.1} parent=1 // pred_fallthru
      _
    // Predicated region
    $region14: #{tpu_custom_call.1} parent=1 // pred_check
      _
    $region15: #{tpu_custom_call.1} parent=1 // pred_check_branch
      %44 = sbr.rel (0) target = $region17
    $region16: #{tpu_custom_call.1} parent=1 // pred_region
      %45 = dma.done [#allocation3], 128
    $region17: #{tpu_custom_call.1} parent=1 // pred_fallthru
      _
    // Predicated region
    $region18: #{tpu_custom_call.1} parent=1 // pred_check
      _
    $region19: #{tpu_custom_call.1} parent=1 // pred_check_branch
      %47 = sbr.rel (0) target = $region21
    $region20: #{tpu_custom_call.1} parent=1 // pred_region
      %48 = dma.done [#allocation6], 2176
    $region21: #{tpu_custom_call.1} parent=1 // pred_fallthru
      _
    // Predicated region
    $region22: #{tpu_custom_call.1} parent=1 // pred_check
      _
    $region23: #{tpu_custom_call.1} parent=1 // pred_check_branch
      %50 = sbr.rel (0) target = $region25
    $region24: #{tpu_custom_call.1} parent=1 // pred_region
      %51 = dma.done [#allocation6], 128
    $region25: #{tpu_custom_call.1} parent=1 // pred_fallthru
      _
    %v53 = vld [vmem:[#allocation2] sm:$0xff]
    %v54 = vpack.c.bf16 %v53, %v53
    %v55 = vld [vmem:[#allocation5] sm:$0xf]
    %v56 = vld [vmem:[#allocation5 + $0x4] sm:$0xf]
    %v57 = vld [vmem:[#allocation5 + $0x8] sm:$0xf]
    %v58 = vld [vmem:[#allocation5 + $0xc] sm:$0xf]
    %v59 = vld [vmem:[#allocation5 + $0x10] sm:$0xf]
    %v60 = vld [vmem:[#allocation5 + $0x14] sm:$0xf]
    %v61 = vld [vmem:[#allocation5 + $0x18] sm:$0xf]
    %v62 = vld [vmem:[#allocation5 + $0x1c] sm:$0xf]
    %v63 = vld [vmem:[#allocation5 + $0x20] sm:$0xf]
    %v64 = vld [vmem:[#allocation5 + $0x24] sm:$0xf]
    %v65 = vld [vmem:[#allocation5 + $0x28] sm:$0xf]
    %v66 = vld [vmem:[#allocation5 + $0x2c] sm:$0xf]
    %v67 = vld [vmem:[#allocation5 + $0x30] sm:$0xf]
    %v68 = vld [vmem:[#allocation5 + $0x34] sm:$0xf]
    %v69 = vld [vmem:[#allocation5 + $0x38] sm:$0xf]
    %v70 = vld [vmem:[#allocation5 + $0x3c] sm:$0xf]
    %v71 = vld [vmem:[#allocation5 + $0x40] sm:$0xf]
    %v72 = vld [vmem:[#allocation5 + $0x44] sm:$0xf]
    %v73 = vld [vmem:[#allocation5 + $0x48] sm:$0xf]
    %v74 = vld [vmem:[#allocation5 + $0x4c] sm:$0xf]
    %v75 = vld [vmem:[#allocation5 + $0x50] sm:$0xf]
    %v76 = vld [vmem:[#allocation5 + $0x54] sm:$0xf]
    %v77 = vld [vmem:[#allocation5 + $0x58] sm:$0xf]
    %v78 = vld [vmem:[#allocation5 + $0x5c] sm:$0xf]
    %v79 = vld [vmem:[#allocation5 + $0x60] sm:$0xf]
    %v80 = vld [vmem:[#allocation5 + $0x64] sm:$0xf]
    %v81 = vld [vmem:[#allocation5 + $0x68] sm:$0xf]
    %v82 = vld [vmem:[#allocation5 + $0x6c] sm:$0xf]
    %v83 = vld [vmem:[#allocation5 + $0x70] sm:$0xf]
    %v84 = vld [vmem:[#allocation5 + $0x74] sm:$0xf]
    %v85 = vld [vmem:[#allocation5 + $0x78] sm:$0xf]
    %v86 = vld [vmem:[#allocation5 + $0x7c] sm:$0xf]
    %v87 = vld [vmem:[#allocation5 + $0x80] sm:$0xf]
    %v88 = vld [vmem:[#allocation5 + $0x84] sm:$0xf]
    %v89 = vld [vmem:[#allocation7] sm:$0xff]
    %v90 = vlaneseq
    %v91 = vshrl.u32 %v90, 7
    %v92 = vsub.s32 0, %v91
    %v93 = vrot.slane %v89, %v92
    %v96 = vunpack.c.l.b16 %v55
    %v97 = vunpack.c.l.b16 %v56
    %v98 = vpack.c.b16 %v97, %v96
    %vm100 = vcmask 130048
    %v102 = vsel %vm100, %v54, 0
    %104 = vmatprep.subr.bf16.mxu0 0
    %105 = vmatpush1.bf16.msra.mxu0 %v98
    %106 = vmatprep.subr.bf16.mxu0 0
    %107 = vmatpush1.bf16.msra.mxu0 0
    %108 = vmatprep.subr.bf16.mxu0 0
    %109 = vmatpush1.bf16.msra.mxu0 0
    %110 = vmatprep.subr.bf16.mxu0 0
    %111 = vmatpush1.bf16.msra.mxu0 0
    %112 = vmatprep.subr.bf16.mxu0 0
    %113 = vmatpush1.bf16.msra.mxu0 0
    %114 = vmatprep.subr.bf16.mxu0 0
    %115 = vmatpush1.bf16.msra.mxu0 0
    %116 = vmatprep.subr.bf16.mxu0 0
    %117 = vmatpush1.bf16.msra.mxu0 0
    %118 = vmatprep.subr.bf16.mxu0 0
    %119 = vmatpush1.bf16.msra.mxu0 0
    %120 = vmatprep.subr.bf16.mxu0 0
    %121 = vmatpush1.bf16.msra.mxu0 0
    %122 = vmatprep.subr.bf16.mxu0 0
    %123 = vmatpush1.bf16.msra.mxu0 0
    %124 = vmatprep.subr.bf16.mxu0 0
    %125 = vmatpush1.bf16.msra.mxu0 0
    %126 = vmatprep.subr.bf16.mxu0 0
    %127 = vmatpush1.bf16.msra.mxu0 0
    %128 = vmatprep.subr.bf16.mxu0 0
    %129 = vmatpush1.bf16.msra.mxu0 0
    %130 = vmatprep.subr.bf16.mxu0 0
    %131 = vmatpush1.bf16.msra.mxu0 0
    %132 = vmatprep.subr.bf16.mxu0 0
    %133 = vmatpush1.bf16.msra.mxu0 0
    %134 = vmatprep.subr.bf16.mxu0 0
    %135 = vmatpush1.bf16.msra.mxu0 0
    %136 = vmatprep.mubr.bf16.mxu0 0
    %137 = vmatmul.mubr.bf16.gmra.mrb[0].mxu0 %v102
    %v138 = vpop.f32.mrb[0].mxu0
    %v139 = vadd.f32 %v93, %v138
    %v140 = vpop.f32.mrb[0].mxu0
    %v141 = vpop.f32.mrb[0].mxu0
    %v142 = vpop.f32.mrb[0].mxu0
    %143 = vdwg.mxu0
    %v144 = vmax.f32 %v139, 0.0
    %v145 = vpack.c.bf16 %v144, %v144
    %v146 = vlaneseq
    %v147 = vshrl.u32 %v146, 7
    %v148 = vsub.s32 1, %v147
    %v149 = vrot.slane %v89, %v148
    %v166 = vunpack.c.l.b16 %v57
    %v167 = vunpack.c.l.b16 %v58
    %v168 = vunpack.c.l.b16 %v59
    %v169 = vunpack.c.l.b16 %v60
    %v170 = vunpack.c.l.b16 %v61
    %v171 = vunpack.c.l.b16 %v62
    %v172 = vunpack.c.l.b16 %v63
    %v173 = vunpack.c.l.b16 %v64
    %v174 = vunpack.c.l.b16 %v65
    %v175 = vunpack.c.l.b16 %v66
    %v176 = vunpack.c.l.b16 %v67
    %v177 = vunpack.c.l.b16 %v68
    %v178 = vunpack.c.l.b16 %v69
    %v179 = vunpack.c.l.b16 %v70
    %v180 = vunpack.c.l.b16 %v71
    %v181 = vunpack.c.l.b16 %v72
    %v182 = vpack.c.b16 %v167, %v166
    %v183 = vpack.c.b16 %v169, %v168
    %v184 = vpack.c.b16 %v171, %v170
    %v185 = vpack.c.b16 %v173, %v172
    %v186 = vpack.c.b16 %v175, %v174
    %v187 = vpack.c.b16 %v177, %v176
    %v188 = vpack.c.b16 %v179, %v178
    %v189 = vpack.c.b16 %v181, %v180
    %198 = vmatprep.subr.bf16.mxu0 0
    %199 = vmatpush1.bf16.msra.mxu0 %v182
    %200 = vmatprep.subr.bf16.mxu0 0
    %201 = vmatpush1.bf16.msra.mxu0 %v183
    %202 = vmatprep.subr.bf16.mxu0 0
    %203 = vmatpush1.bf16.msra.mxu0 %v184
    %204 = vmatprep.subr.bf16.mxu0 0
    %205 = vmatpush1.bf16.msra.mxu0 %v185
    %206 = vmatprep.subr.bf16.mxu0 0
    %207 = vmatpush1.bf16.msra.mxu0 %v186
    %208 = vmatprep.subr.bf16.mxu0 0
    %209 = vmatpush1.bf16.msra.mxu0 %v187
    %210 = vmatprep.subr.bf16.mxu0 0
    %211 = vmatpush1.bf16.msra.mxu0 %v188
    %212 = vmatprep.subr.bf16.mxu0 0
    %213 = vmatpush1.bf16.msra.mxu0 %v189
    %214 = vmatprep.subr.bf16.mxu0 0
    %215 = vmatpush1.bf16.msra.mxu0 0
    %216 = vmatprep.subr.bf16.mxu0 0
    %217 = vmatpush1.bf16.msra.mxu0 0
    %218 = vmatprep.subr.bf16.mxu0 0
    %219 = vmatpush1.bf16.msra.mxu0 0
    %220 = vmatprep.subr.bf16.mxu0 0
    %221 = vmatpush1.bf16.msra.mxu0 0
    %222 = vmatprep.subr.bf16.mxu0 0
    %223 = vmatpush1.bf16.msra.mxu0 0
    %224 = vmatprep.subr.bf16.mxu0 0
    %225 = vmatpush1.bf16.msra.mxu0 0
    %226 = vmatprep.subr.bf16.mxu0 0
    %227 = vmatpush1.bf16.msra.mxu0 0
    %228 = vmatprep.subr.bf16.mxu0 0
    %229 = vmatpush1.bf16.msra.mxu0 0
    %230 = vmatprep.mubr.bf16.mxu0 0
    %231 = vmatmul.mubr.bf16.gmra.mrb[0].mxu0 %v145
    %v232 = vpop.f32.mrb[0].mxu0
    %v233 = vadd.f32 %v149, %v232
    %v234 = vpop.f32.mrb[0].mxu0
    %v235 = vpop.f32.mrb[0].mxu0
    %v236 = vpop.f32.mrb[0].mxu0
    %237 = vdwg.mxu0
    %v238 = vmax.f32 %v233, 0.0
    %v239 = vpack.c.bf16 %v238, %v238
    %v240 = vlaneseq
    %v241 = vshrl.u32 %v240, 7
    %v242 = vsub.s32 2, %v241
    %v243 = vrot.slane %v89, %v242
    %v260 = vunpack.c.l.b16 %v73
    %v261 = vunpack.c.l.b16 %v74
    %v262 = vunpack.c.l.b16 %v75
    %v263 = vunpack.c.l.b16 %v76
    %v264 = vunpack.c.l.b16 %v77
    %v265 = vunpack.c.l.b16 %v78
    %v266 = vunpack.c.l.b16 %v79
    %v267 = vunpack.c.l.b16 %v80
    %v268 = vunpack.c.l.b16 %v81
    %v269 = vunpack.c.l.b16 %v82
    %v270 = vunpack.c.l.b16 %v83
    %v271 = vunpack.c.l.b16 %v84
    %v272 = vunpack.c.l.b16 %v85
    %v273 = vunpack.c.l.b16 %v86
    %v274 = vunpack.c.l.b16 %v87
    %v275 = vunpack.c.l.b16 %v88
    %v276 = vpack.c.b16 %v261, %v260
    %v277 = vpack.c.b16 %v263, %v262
    %v278 = vpack.c.b16 %v265, %v264
    %v279 = vpack.c.b16 %v267, %v266
    %v280 = vpack.c.b16 %v269, %v268
    %v281 = vpack.c.b16 %v271, %v270
    %v282 = vpack.c.b16 %v273, %v272
    %v283 = vpack.c.b16 %v275, %v274
    %292 = vmatprep.subr.bf16.mxu0 0
    %293 = vmatpush1.bf16.msra.mxu0 %v276
    %294 = vmatprep.subr.bf16.mxu0 0
    %295 = vmatpush1.bf16.msra.mxu0 %v277
    %296 = vmatprep.subr.bf16.mxu0 0
    %297 = vmatpush1.bf16.msra.mxu0 %v278
    %298 = vmatprep.subr.bf16.mxu0 0
    %299 = vmatpush1.bf16.msra.mxu0 %v279
    %300 = vmatprep.subr.bf16.mxu0 0
    %301 = vmatpush1.bf16.msra.mxu0 %v280
    %302 = vmatprep.subr.bf16.mxu0 0
    %303 = vmatpush1.bf16.msra.mxu0 %v281
    %304 = vmatprep.subr.bf16.mxu0 0
    %305 = vmatpush1.bf16.msra.mxu0 %v282
    %306 = vmatprep.subr.bf16.mxu0 0
    %307 = vmatpush1.bf16.msra.mxu0 %v283
    %308 = vmatprep.subr.bf16.mxu0 0
    %309 = vmatpush1.bf16.msra.mxu0 0
    %310 = vmatprep.subr.bf16.mxu0 0
    %311 = vmatpush1.bf16.msra.mxu0 0
    %312 = vmatprep.subr.bf16.mxu0 0
    %313 = vmatpush1.bf16.msra.mxu0 0
    %314 = vmatprep.subr.bf16.mxu0 0
    %315 = vmatpush1.bf16.msra.mxu0 0
    %316 = vmatprep.subr.bf16.mxu0 0
    %317 = vmatpush1.bf16.msra.mxu0 0
    %318 = vmatprep.subr.bf16.mxu0 0
    %319 = vmatpush1.bf16.msra.mxu0 0
    %320 = vmatprep.subr.bf16.mxu0 0
    %321 = vmatpush1.bf16.msra.mxu0 0
    %322 = vmatprep.subr.bf16.mxu0 0
    %323 = vmatpush1.bf16.msra.mxu0 0
    %324 = vmatprep.mubr.bf16.mxu0 0
    %325 = vmatmul.mubr.bf16.gmra.mrb[0].mxu0 %v239
    %v326 = vpop.f32.mrb[0].mxu0
    %v327 = vadd.f32 %v243, %v326
    %v328 = vpop.f32.mrb[0].mxu0
    %v329 = vpop.f32.mrb[0].mxu0
    %v330 = vpop.f32.mrb[0].mxu0
    %331 = vdwg.mxu0
    %332 = vmax.xlane.f32.xlu0 %v327
    %v333 = vpop.xlane.xlu0 %332
    %v334 = vsub.f32 %v327, %v333
    %v335 = vmul.f32 %v334, 1.442695
    %v336 = vpow.pop %v335
    %337 = vadd.xlane.f32.xlu0 %v336
    %v338 = vpop.xlane.xlu0 %337
    %v339 = vrcp.pop %v338
    %v340 = vmul.f32 1.0, %v339
    %v341 = vmul.f32 %v336, %v340
    %vm342 = vcmask 64512
    %343 = vst.msk [vmem:[#allocation8] sm:$0xff] %vm342, %v341
    // Predicated region
    $region26: #{tpu_custom_call.1} parent=1 // pred_check
      _
    $region27: #{tpu_custom_call.1} parent=1 // pred_check_branch
      %345 = sbr.rel (0) target = $region29
    $region28: #{tpu_custom_call.1} parent=1 // pred_region
      %s347 = ssub.s32 128, 128
      %348 = vsyncadd [#allocation4], %s347
      %s350 = sshll.u32 [#allocation8], 4
      %s351 = int_to_ptr.vmem [resolvable:$true] %s350
      %353 = dma.vmem_to_hbm [thread:$0]  %s351, 128, %s3, [#allocation4]
    $region29: #{tpu_custom_call.1} parent=1 // pred_fallthru
      _
    // Predicated region
    $region30: #{tpu_custom_call.1} parent=1 // pred_check
      _
    $region31: #{tpu_custom_call.1} parent=1 // pred_check_branch
      %355 = sbr.rel (0) target = $region33
    $region32: #{tpu_custom_call.1} parent=1 // pred_region
      %356 = dma.done [#allocation4], 128
    $region33: #{tpu_custom_call.1} parent=1 // pred_fallthru
      _
    %357 = vsyncpa [#allocation3], 1
    %358 = vsyncpa [#allocation6], 1
    %359 = vsyncpa [#allocation4], 1

</llo_original>
